<compile_context>
chip_gen: v7x
topology: tpu7x:2x2x1
jax: 0.10.0
libtpu: 0.0.40
codegen_flags: <defaults>
</compile_context>

<pallas_src>
import jax
import jax.numpy as jnp
from jax.experimental import pallas as pl
from jax.experimental.pallas import tpu as pltpu

LN_EPS = 1e-5


def _layernorm_relu(h_f32, gamma_f32, beta_f32):
    # TODO(synk): if a v5e bundle dump shows VALU-bound, switch to var = E[x^2] - mu^2 and fold
    # the bias-add / bf16 round-trip into a single pass (minor, acceptable numerics change).
    mu = jnp.mean(h_f32, axis=-1, keepdims=True)
    var = jnp.mean((h_f32 - mu) ** 2, axis=-1, keepdims=True)
    hn = (h_f32 - mu) * jax.lax.rsqrt(var + LN_EPS)
    return jnp.maximum(hn * gamma_f32 + beta_f32, 0.0)


def deep_critic_head_kernel(
    x_ref,     # (bm, D)  native input dtype (f32/bf16)
    w1_ref,    # (D, H)   bf16, pre-transposed
    w2_ref,    # (H, H)   bf16, pre-transposed
    vecs_ref,  # (8, H)   f32: rows = b1, g1, beta1, b2, g2, beta2, 0, 0
    wf_ref,    # (1, H)   bf16 fc weight row
    bf_ref,    # (1,)     f32 fc bias, SMEM
    o_ref,     # (1, bm)  bf16 lane-dense output row
):
    # x.to(bfloat16) happens here on the VMEM tile (no extra HBM pass in the wrapper).
    x_bf16 = x_ref[...].astype(jnp.bfloat16)

    vecs = vecs_ref[...]
    b1, g1, beta1 = vecs[0:1], vecs[1:2], vecs[2:3]
    b2, g2, beta2 = vecs[3:4], vecs[4:5], vecs[5:6]

    # ---- proj layer 1: Linear -> LayerNorm -> ReLU ----
    h = jnp.dot(x_bf16, w1_ref[...], preferred_element_type=jnp.float32) + b1
    h = h.astype(jnp.bfloat16).astype(jnp.float32)          # bf16 activation-storage round trip
    h = _layernorm_relu(h, g1, beta1).astype(jnp.bfloat16)

    # ---- proj layer 2: Linear -> LayerNorm -> ReLU ----
    # TODO(synk): for very large H on v7x (64 MiB VMEM), K-tile this matmul (stream w2 in H-chunks
    # over an "arbitrary" grid axis with an f32 accumulator) instead of keeping (H,H) resident.
    h2 = jnp.dot(h, w2_ref[...], preferred_element_type=jnp.float32) + b2
    h2 = h2.astype(jnp.bfloat16).astype(jnp.float32)
    h2 = _layernorm_relu(h2, g2, beta2).astype(jnp.bfloat16)

    # ---- fc: hidden -> 1, as (1,H) x (bm,H)^T -> (1, bm), so the store is lane-dense ----
    v_row = jax.lax.dot_general(
        wf_ref[...], h2,
        dimension_numbers=(((1,), (1,)), ((), ())),
        preferred_element_type=jnp.float32,
    )
    o_ref[...] = (v_row + bf_ref[0]).astype(o_ref.dtype)


def _round_up(a, m):
    return ((a + m - 1) // m) * m


def _tpu_caps():
    """(vmem_capacity_bytes, has_two_tensorcores) with safe fallbacks."""
    vmem_cap = 128 << 20
    two_cores = False
    try:
        kind = jax.devices()[0].device_kind.lower()
        two_cores = any(t in kind for t in ("v7", "v5p", "v4"))
        if "v7" in kind:
            vmem_cap = 64 << 20
    except Exception:
        pass
    try:
        vmem_cap = int(getattr(pltpu.get_tpu_info(), "vmem_capacity_bytes", vmem_cap))
    except Exception:
        pass
    return vmem_cap, two_cores


def _footprint_bytes(bb, D, H, x_itemsize, single_buffer_consts):
    wbuf = 1 if single_buffer_consts else 2
    weights = wbuf * ((D * H + H * H + H) * 2 + 8 * H * 4)   # w1, w2, wf (bf16) + (8,H) f32 vecs
    x_tiles = 2 * bb * D * x_itemsize                        # double-buffered x stream
    out_tiles = 2 * 8 * max(bb, 128) * 2                     # double-buffered (1, bb) bf16 row (padded)
    inter = bb * (2 * D + 12 * H)                            # bf16 x copy + f32/bf16 h, h2
    return weights + x_tiles + out_tiles + inter


def deep_critic_head(x, params, *, block_b=None):
    """x: (B, input_size) any float dtype. Returns (B, 1) bf16 (module output dtype)."""
    B, D = x.shape
    H = params["w1"].shape[1]
    vmem_cap, two_cores = _tpu_caps()
    x_isz = x.dtype.itemsize

    # ---- batch-tile heuristic (generation aware) ----
    if block_b is None:
        if two_cores and B > 128:
            # >= 2 grid steps so the "parallel" axis shards across both TensorCores.
            block_b = min(512, _round_up(pl.cdiv(B, 2), 128))
        elif B <= 512:
            block_b = B                                       # single block, full extent
        else:
            target = 1024 if vmem_cap >= (96 << 20) else 512  # big tiles amortize per-step overhead
            block_b = min(target, _round_up(B, 128))
        if block_b != B:
            budget = int(0.70 * vmem_cap)
            while block_b > 128 and _footprint_bytes(block_b, D, H, x_isz, True) > budget:
                block_b -= 128
    if block_b != B:
        assert block_b % 128 == 0, "tiled block_b must be a multiple of 128"

    b_pad = _round_up(B, block_b)
    x_p = jnp.pad(x, ((0, b_pad - B), (0, 0))) if b_pad != B else x
    n_blocks = b_pad // block_b

    # ---- parameter packing (would be hoisted / cached once in a real training setup) ----
    f32 = lambda a: a.astype(jnp.float32)
    vecs = jnp.concatenate(
        [f32(params["b1"]), f32(params["g1"]), f32(params["beta1"]),
         f32(params["b2"]), f32(params["g2"]), f32(params["beta2"]),
         jnp.zeros((2, H), jnp.float32)], axis=0)            # (8, H): one DMA, one VMEM block
    wf_row = params["wf"]                                    # (1, H) bf16
    bf = f32(params["bf"]).reshape(-1)                       # (1,) scalar -> SMEM

    # ---- VMEM budget: estimate already includes pipeline buffers; cap below physical VMEM ----
    est = _footprint_bytes(block_b, D, H, x_isz, True) + (8 << 20)
    vmem_limit = int(min(max(est, 32 << 20), int(0.85 * vmem_cap)))

    def build(single_buffer_consts):
        kw = {}
        if single_buffer_consts and hasattr(pl, "Buffered"):
            # Constant-index inputs: index_map is always (0,0) -> single buffer, halve footprint.
            kw = dict(pipeline_mode=pl.Buffered(buffer_count=1))
        const = lambda shape: pl.BlockSpec(shape, lambda i: (0, 0), **kw)
        return pl.pallas_call(
            deep_critic_head_kernel,
            out_shape=jax.ShapeDtypeStruct((1, b_pad), jnp.bfloat16),
            grid_spec=pltpu.PrefetchScalarGridSpec(
                num_scalar_prefetch=0,
                grid=(n_blocks,),
                in_specs=[
                    pl.BlockSpec((block_b, D), lambda i: (i, 0)),        # x, streamed per batch tile
                    const((D, H)),                                        # w1
                    const((H, H)),                                        # w2
                    const((8, H)),                                        # stacked bias/LN vectors
                    const((1, H)),                                        # fc weight row
                    pl.BlockSpec(memory_space=pltpu.MemorySpace.SMEM),    # fc bias scalar
                ],
                out_specs=pl.BlockSpec((1, block_b), lambda i: (0, i)),   # lane-dense output row
            ),
            compiler_params=pltpu.CompilerParams(
                dimension_semantics=("parallel",),
                vmem_limit_bytes=vmem_limit,
            ),
        )

    args = (x_p, params["w1"], params["w2"], vecs, wf_row, bf)
    try:
        out_row = build(True)(*args)
    except Exception:
        # TODO(synk): drop this fallback once pl.Buffered(1) single-buffering is confirmed on the
        # deployed jax version; double-buffered constants only cost extra VMEM, not correctness.
        out_row = build(False)(*args)

    return out_row[0, :B].reshape(B, 1)


def init_params(key, input_size, hidden_size):
    """Deterministic synthetic init matching the PyTorch module's parameter shapes."""
    k1, k2, k3 = jax.random.split(key, 3)
    bound1 = 1.0 / jnp.sqrt(input_size)
    bound2 = 1.0 / jnp.sqrt(hidden_size)
    # Linear weights stored pre-transposed: (in, out)
    w1 = jax.random.uniform(k1, (input_size, hidden_size), jnp.float32, -bound1, bound1)
    b1 = jnp.zeros((1, hidden_size), jnp.float32)
    w2 = jax.random.uniform(k2, (hidden_size, hidden_size), jnp.float32, -bound2, bound2)
    b2 = jnp.zeros((1, hidden_size), jnp.float32)
    # LayerNorm: weight=1, bias=0
    g1 = jnp.ones((1, hidden_size), jnp.float32)
    beta1 = jnp.zeros((1, hidden_size), jnp.float32)
    g2 = jnp.ones((1, hidden_size), jnp.float32)
    beta2 = jnp.zeros((1, hidden_size), jnp.float32)
    # fc: orthogonal init weight, natural torch shape (1, hidden); bias = 0
    wf = jax.nn.initializers.orthogonal()(k3, (1, hidden_size), jnp.float32)
    bf = jnp.zeros((1, 1), jnp.float32)
    params = dict(w1=w1, b1=b1, g1=g1, beta1=beta1,
                  w2=w2, b2=b2, g2=g2, beta2=beta2,
                  wf=wf, bf=bf)
    # module runs in bf16 (use_b16=True)
    return {k: v.astype(jnp.bfloat16) for k, v in params.items()}


def reference_forward(x, params):
    """Pure-JAX reference of DeepCriticHead.forward_norm for sanity checking."""
    f32 = lambda a: a.astype(jnp.float32)
    h = jnp.dot(x.astype(jnp.bfloat16), params["w1"], preferred_element_type=jnp.float32)
    h = (h + f32(params["b1"])).astype(jnp.bfloat16)
    hf = f32(h)
    mu = hf.mean(-1, keepdims=True)
    var = ((hf - mu) ** 2).mean(-1, keepdims=True)
    h = jnp.maximum((hf - mu) * jax.lax.rsqrt(var + LN_EPS) * f32(params["g1"])
                    + f32(params["beta1"]), 0.0).astype(jnp.bfloat16)
    h2 = jnp.dot(h, params["w2"], preferred_element_type=jnp.float32)
    h2 = (h2 + f32(params["b2"])).astype(jnp.bfloat16)
    hf = f32(h2)
    mu = hf.mean(-1, keepdims=True)
    var = ((hf - mu) ** 2).mean(-1, keepdims=True)
    h2 = jnp.maximum((hf - mu) * jax.lax.rsqrt(var + LN_EPS) * f32(params["g2"])
                     + f32(params["beta2"]), 0.0).astype(jnp.bfloat16)
    v = jnp.dot(h2, params["wf"].T, preferred_element_type=jnp.float32) + f32(params["bf"])
    return v.astype(jnp.bfloat16)


if __name__ == "__main__":
    key = jax.random.PRNGKey(0)
    kx, kp, kx2, kx3 = jax.random.split(key, 4)

    # Small shapes consistent with the module.
    batch, input_size, hidden_size = 8, 32, 32
    x = jax.random.normal(kx, (batch, input_size), jnp.float32)
    params = init_params(kp, input_size, hidden_size)

    out = jax.block_until_ready(deep_critic_head(x, params))
    assert out.shape == (batch, 1) and out.dtype == jnp.bfloat16
    ref = jax.block_until_ready(reference_forward(x, params))
    err = float(jnp.max(jnp.abs(out.astype(jnp.float32) - ref.astype(jnp.float32))))
    assert err < 1e-1, f"mismatch vs reference (small batch): {err}"

    # Larger batch: exercises the generation-aware block_b heuristic (single big tile on
    # v5e/v6e; >=2-block megacore split on v7x/v5p/v4).
    big_batch = 384
    xb = jax.random.normal(kx2, (big_batch, input_size), jnp.float32)
    out_b = jax.block_until_ready(deep_critic_head(xb, params))
    assert out_b.shape == (big_batch, 1) and out_b.dtype == jnp.bfloat16
    ref_b = jax.block_until_ready(reference_forward(xb, params))
    err_b = float(jnp.max(jnp.abs(out_b.astype(jnp.float32) - ref_b.astype(jnp.float32))))
    assert err_b < 1e-1, f"mismatch vs reference (big batch): {err_b}"

    # Explicitly tiled + padded path (multi-step "parallel" grid) regardless of chip generation.
    rag_batch = 200
    xr = jax.random.normal(kx3, (rag_batch, input_size), jnp.float32)
    out_r = jax.block_until_ready(deep_critic_head(xr, params, block_b=128))
    assert out_r.shape == (rag_batch, 1) and out_r.dtype == jnp.bfloat16
    ref_r = jax.block_until_ready(reference_forward(xr, params))
    err_r = float(jnp.max(jnp.abs(out_r.astype(jnp.float32) - ref_r.astype(jnp.float32))))
    assert err_r < 1e-1, f"mismatch vs reference (tiled/padded): {err_r}"

    print("KERNEL_OK")
</pallas_src>

<mosaic_0001>
module attributes {stable_mosaic.version = 11 : i64} {
  func.func @deep_critic_head_kernel(%arg0: i32, %arg1: memref<8x32xf32, #tpu.memory_space<vmem>>, %arg2: memref<32x32xbf16, #tpu.memory_space<vmem>>, %arg3: memref<32x32xbf16, #tpu.memory_space<vmem>>, %arg4: memref<8x32xf32, #tpu.memory_space<vmem>>, %arg5: memref<1x32xbf16, #tpu.memory_space<vmem>>, %arg6: memref<1xf32, #tpu.memory_space<smem>>, %arg7: memref<1x8xbf16, #tpu.memory_space<vmem>>) attributes {dimension_semantics = [#tpu.dimension_semantics<parallel>], iteration_bounds = array<i64: 1>, scalar_prefetch = 0 : i64, scratch_operands = 0 : i64, tpu.core_type = #tpu.core_type<tc>, window_params = [{transform_indices = @transform_0, window_bounds = array<i64: 8, 32>}, {pipeline_mode = #tpu.pipeline_mode<synchronous>, transform_indices = @transform_1, window_bounds = array<i64: 32, 32>}, {pipeline_mode = #tpu.pipeline_mode<synchronous>, transform_indices = @transform_2, window_bounds = array<i64: 32, 32>}, {pipeline_mode = #tpu.pipeline_mode<synchronous>, transform_indices = @transform_3, window_bounds = array<i64: 8, 32>}, {pipeline_mode = #tpu.pipeline_mode<synchronous>, transform_indices = @transform_4, window_bounds = array<i64: 1, 32>}, {transform_indices = @transform_5, window_bounds = array<i64: 1>}, {transform_indices = @transform_6, window_bounds = array<i64: 1, 8>}]} {
    %c0 = arith.constant 0 : index
    %c0_0 = arith.constant 0 : index
    %0 = vector.load %arg1[%c0, %c0_0] : memref<8x32xf32, #tpu.memory_space<vmem>>, vector<8x32xf32>
    %1 = arith.truncf %0 : vector<8x32xf32> to vector<8x32xbf16>
    %c0_1 = arith.constant 0 : index
    %c0_2 = arith.constant 0 : index
    %2 = vector.load %arg4[%c0_1, %c0_2] : memref<8x32xf32, #tpu.memory_space<vmem>>, vector<8x32xf32>
    %3 = vector.extract_strided_slice %2 {offsets = [0, 0], sizes = [1, 32], strides = [1, 1]} : vector<8x32xf32> to vector<1x32xf32>
    %4 = vector.extract_strided_slice %2 {offsets = [1, 0], sizes = [1, 32], strides = [1, 1]} : vector<8x32xf32> to vector<1x32xf32>
    %5 = vector.extract_strided_slice %2 {offsets = [2, 0], sizes = [1, 32], strides = [1, 1]} : vector<8x32xf32> to vector<1x32xf32>
    %6 = vector.extract_strided_slice %2 {offsets = [3, 0], sizes = [1, 32], strides = [1, 1]} : vector<8x32xf32> to vector<1x32xf32>
    %7 = vector.extract_strided_slice %2 {offsets = [4, 0], sizes = [1, 32], strides = [1, 1]} : vector<8x32xf32> to vector<1x32xf32>
    %8 = vector.extract_strided_slice %2 {offsets = [5, 0], sizes = [1, 32], strides = [1, 1]} : vector<8x32xf32> to vector<1x32xf32>
    %c0_3 = arith.constant 0 : index
    %c0_4 = arith.constant 0 : index
    %9 = vector.load %arg2[%c0_3, %c0_4] : memref<32x32xbf16, #tpu.memory_space<vmem>>, vector<32x32xbf16>
    %cst = arith.constant dense<0.000000e+00> : vector<8x32xf32>
    %10 = tpu.matmul %1, %9, %cst {dimension_numbers = #tpu.dot_dimension_numbers<[1], [0], [0], [1], [0, 0, 1, 1], [], []>} : vector<8x32xbf16>, vector<32x32xbf16>, vector<8x32xf32> -> vector<8x32xf32>
    %11 = vector.broadcast %3 : vector<1x32xf32> to vector<8x32xf32>
    %12 = arith.addf %10, %11 : vector<8x32xf32>
    %13 = arith.truncf %12 : vector<8x32xf32> to vector<8x32xbf16>
    %14 = arith.extf %13 : vector<8x32xbf16> to vector<8x32xf32>
    %cst_5 = arith.constant dense<0.000000e+00> : vector<8xf32>
    %15 = vector.multi_reduction <add>, %14, %cst_5 [1] : vector<8x32xf32> to vector<8xf32>
    %16 = vector.shape_cast %15 : vector<8xf32> to vector<8x1xf32>
    %cst_6 = arith.constant 3.200000e+01 : f32
    %17 = vector.broadcast %cst_6 : f32 to vector<8x1xf32>
    %18 = arith.divf %16, %17 : vector<8x1xf32>
    %19 = vector.broadcast %18 : vector<8x1xf32> to vector<8x32xf32>
    %20 = arith.subf %14, %19 : vector<8x32xf32>
    %21 = arith.mulf %20, %20 : vector<8x32xf32>
    %cst_7 = arith.constant dense<0.000000e+00> : vector<8xf32>
    %22 = vector.multi_reduction <add>, %21, %cst_7 [1] : vector<8x32xf32> to vector<8xf32>
    %23 = vector.shape_cast %22 : vector<8xf32> to vector<8x1xf32>
    %cst_8 = arith.constant 3.200000e+01 : f32
    %24 = vector.broadcast %cst_8 : f32 to vector<8x1xf32>
    %25 = arith.divf %23, %24 : vector<8x1xf32>
    %26 = vector.broadcast %18 : vector<8x1xf32> to vector<8x32xf32>
    %27 = arith.subf %14, %26 : vector<8x32xf32>
    %cst_9 = arith.constant 9.99999974E-6 : f32
    %28 = vector.broadcast %cst_9 : f32 to vector<8x1xf32>
    %29 = arith.addf %25, %28 : vector<8x1xf32>
    %30 = math.rsqrt %29 : vector<8x1xf32>
    %31 = vector.broadcast %30 : vector<8x1xf32> to vector<8x32xf32>
    %32 = arith.mulf %27, %31 : vector<8x32xf32>
    %33 = vector.broadcast %4 : vector<1x32xf32> to vector<8x32xf32>
    %34 = arith.mulf %32, %33 : vector<8x32xf32>
    %35 = vector.broadcast %5 : vector<1x32xf32> to vector<8x32xf32>
    %36 = arith.addf %34, %35 : vector<8x32xf32>
    %cst_10 = arith.constant 0.000000e+00 : f32
    %37 = vector.broadcast %cst_10 : f32 to vector<8x32xf32>
    %38 = arith.maximumf %36, %37 : vector<8x32xf32>
    %39 = arith.truncf %38 : vector<8x32xf32> to vector<8x32xbf16>
    %c0_11 = arith.constant 0 : index
    %c0_12 = arith.constant 0 : index
    %40 = vector.load %arg3[%c0_11, %c0_12] : memref<32x32xbf16, #tpu.memory_space<vmem>>, vector<32x32xbf16>
    %cst_13 = arith.constant dense<0.000000e+00> : vector<8x32xf32>
    %41 = tpu.matmul %39, %40, %cst_13 {dimension_numbers = #tpu.dot_dimension_numbers<[1], [0], [0], [1], [0, 0, 1, 1], [], []>} : vector<8x32xbf16>, vector<32x32xbf16>, vector<8x32xf32> -> vector<8x32xf32>
    %42 = vector.broadcast %6 : vector<1x32xf32> to vector<8x32xf32>
    %43 = arith.addf %41, %42 : vector<8x32xf32>
    %44 = arith.truncf %43 : vector<8x32xf32> to vector<8x32xbf16>
    %45 = arith.extf %44 : vector<8x32xbf16> to vector<8x32xf32>
    %cst_14 = arith.constant dense<0.000000e+00> : vector<8xf32>
    %46 = vector.multi_reduction <add>, %45, %cst_14 [1] : vector<8x32xf32> to vector<8xf32>
    %47 = vector.shape_cast %46 : vector<8xf32> to vector<8x1xf32>
    %cst_15 = arith.constant 3.200000e+01 : f32
    %48 = vector.broadcast %cst_15 : f32 to vector<8x1xf32>
    %49 = arith.divf %47, %48 : vector<8x1xf32>
    %50 = vector.broadcast %49 : vector<8x1xf32> to vector<8x32xf32>
    %51 = arith.subf %45, %50 : vector<8x32xf32>
    %52 = arith.mulf %51, %51 : vector<8x32xf32>
    %cst_16 = arith.constant dense<0.000000e+00> : vector<8xf32>
    %53 = vector.multi_reduction <add>, %52, %cst_16 [1] : vector<8x32xf32> to vector<8xf32>
    %54 = vector.shape_cast %53 : vector<8xf32> to vector<8x1xf32>
    %cst_17 = arith.constant 3.200000e+01 : f32
    %55 = vector.broadcast %cst_17 : f32 to vector<8x1xf32>
    %56 = arith.divf %54, %55 : vector<8x1xf32>
    %57 = vector.broadcast %49 : vector<8x1xf32> to vector<8x32xf32>
    %58 = arith.subf %45, %57 : vector<8x32xf32>
    %cst_18 = arith.constant 9.99999974E-6 : f32
    %59 = vector.broadcast %cst_18 : f32 to vector<8x1xf32>
    %60 = arith.addf %56, %59 : vector<8x1xf32>
    %61 = math.rsqrt %60 : vector<8x1xf32>
    %62 = vector.broadcast %61 : vector<8x1xf32> to vector<8x32xf32>
    %63 = arith.mulf %58, %62 : vector<8x32xf32>
    %64 = vector.broadcast %7 : vector<1x32xf32> to vector<8x32xf32>
    %65 = arith.mulf %63, %64 : vector<8x32xf32>
    %66 = vector.broadcast %8 : vector<1x32xf32> to vector<8x32xf32>
    %67 = arith.addf %65, %66 : vector<8x32xf32>
    %cst_19 = arith.constant 0.000000e+00 : f32
    %68 = vector.broadcast %cst_19 : f32 to vector<8x32xf32>
    %69 = arith.maximumf %67, %68 : vector<8x32xf32>
    %70 = arith.truncf %69 : vector<8x32xf32> to vector<8x32xbf16>
    %c0_20 = arith.constant 0 : index
    %c0_21 = arith.constant 0 : index
    %71 = vector.load %arg5[%c0_20, %c0_21] : memref<1x32xbf16, #tpu.memory_space<vmem>>, vector<1x32xbf16>
    %cst_22 = arith.constant dense<0.000000e+00> : vector<1x8xf32>
    %72 = tpu.matmul %71, %70, %cst_22 {dimension_numbers = #tpu.dot_dimension_numbers<[1], [1], [0], [0], [0, 0, 1, 0], [], []>} : vector<1x32xbf16>, vector<8x32xbf16>, vector<1x8xf32> -> vector<1x8xf32>
    %c0_23 = arith.constant 0 : index
    %73 = memref.load %arg6[%c0_23] : memref<1xf32, #tpu.memory_space<smem>>
    %74 = vector.broadcast %73 : f32 to vector<1x8xf32>
    %75 = arith.addf %72, %74 : vector<1x8xf32>
    %76 = arith.truncf %75 : vector<1x8xf32> to vector<1x8xbf16>
    %c0_24 = arith.constant 0 : index
    %c0_25 = arith.constant 0 : index
    %77 = vector.load %arg7[%c0_24, %c0_25] : memref<1x8xbf16, #tpu.memory_space<vmem>>, vector<1x8xbf16>
    tpu.vector_store %arg7[%c0_24, %c0_25], %76 {strides = array<i32>} : memref<1x8xbf16, #tpu.memory_space<vmem>>, vector<1x8xbf16>,
    return
  }
  func.func @transform_0(%arg0: i32) -> (i32, i32) {
    %c0_i32 = arith.constant 0 : i32
    %c0_i32_0 = arith.constant 0 : i32
    return %arg0, %c0_i32 : i32, i32
  }
  func.func @transform_1(%arg0: i32) -> (i32, i32) {
    %c0_i32 = arith.constant 0 : i32
    %c0_i32_0 = arith.constant 0 : i32
    %c0_i32_1 = arith.constant 0 : i32
    return %c0_i32, %c0_i32_0 : i32, i32
  }
  func.func @transform_2(%arg0: i32) -> (i32, i32) {
    %c0_i32 = arith.constant 0 : i32
    %c0_i32_0 = arith.constant 0 : i32
    %c0_i32_1 = arith.constant 0 : i32
    return %c0_i32, %c0_i32_0 : i32, i32
  }
  func.func @transform_3(%arg0: i32) -> (i32, i32) {
    %c0_i32 = arith.constant 0 : i32
    %c0_i32_0 = arith.constant 0 : i32
    %c0_i32_1 = arith.constant 0 : i32
    return %c0_i32, %c0_i32_0 : i32, i32
  }
  func.func @transform_4(%arg0: i32) -> (i32, i32) {
    %c0_i32 = arith.constant 0 : i32
    %c0_i32_0 = arith.constant 0 : i32
    %c0_i32_1 = arith.constant 0 : i32
    return %c0_i32, %c0_i32_0 : i32, i32
  }
  func.func @transform_5(%arg0: i32) -> i32 {
    %c0_i32 = arith.constant 0 : i32
    %c0_i32_0 = arith.constant 0 : i32
    return %c0_i32 : i32
  }
  func.func @transform_6(%arg0: i32) -> (i32, i32) {
    %c0_i32 = arith.constant 0 : i32
    %c0_i32_0 = arith.constant 0 : i32
    return %c0_i32, %arg0 : i32, i32
  }
}

module attributes {stable_mosaic.version = 11 : i64} {
  func.func @deep_critic_head_kernel(%arg0: i32, %arg1: memref<8x32xf32, #tpu.memory_space<vmem>>, %arg2: memref<32x32xbf16, #tpu.memory_space<vmem>>, %arg3: memref<32x32xbf16, #tpu.memory_space<vmem>>, %arg4: memref<8x32xf32, #tpu.memory_space<vmem>>, %arg5: memref<1x32xbf16, #tpu.memory_space<vmem>>, %arg6: memref<1xf32, #tpu.memory_space<smem>>, %arg7: memref<1x8xbf16, #tpu.memory_space<vmem>>) attributes {dimension_semantics = [#tpu.dimension_semantics<parallel>], iteration_bounds = array<i64: 1>, scalar_prefetch = 0 : i64, scratch_operands = 0 : i64, tpu.core_type = #tpu.core_type<tc>, window_params = [{transform_indices = @transform_0, window_bounds = array<i64: 8, 32>}, {pipeline_mode = #tpu.pipeline_mode<synchronous>, transform_indices = @transform_1, window_bounds = array<i64: 32, 32>}, {pipeline_mode = #tpu.pipeline_mode<synchronous>, transform_indices = @transform_2, window_bounds = array<i64: 32, 32>}, {pipeline_mode = #tpu.pipeline_mode<synchronous>, transform_indices = @transform_3, window_bounds = array<i64: 8, 32>}, {pipeline_mode = #tpu.pipeline_mode<synchronous>, transform_indices = @transform_4, window_bounds = array<i64: 1, 32>}, {transform_indices = @transform_5, window_bounds = array<i64: 1>}, {transform_indices = @transform_6, window_bounds = array<i64: 1, 8>}]} {
    %c0 = arith.constant 0 : index
    %c0_0 = arith.constant 0 : index
    %0 = vector.load %arg1[%c0, %c0_0] : memref<8x32xf32, #tpu.memory_space<vmem>>, vector<8x32xf32>
    %1 = arith.truncf %0 : vector<8x32xf32> to vector<8x32xbf16>
    %c0_1 = arith.constant 0 : index
    %c0_2 = arith.constant 0 : index
    %2 = vector.load %arg4[%c0_1, %c0_2] : memref<8x32xf32, #tpu.memory_space<vmem>>, vector<8x32xf32>
    %3 = vector.extract_strided_slice %2 {offsets = [0, 0], sizes = [1, 32], strides = [1, 1]} : vector<8x32xf32> to vector<1x32xf32>
    %4 = vector.extract_strided_slice %2 {offsets = [1, 0], sizes = [1, 32], strides = [1, 1]} : vector<8x32xf32> to vector<1x32xf32>
    %5 = vector.extract_strided_slice %2 {offsets = [2, 0], sizes = [1, 32], strides = [1, 1]} : vector<8x32xf32> to vector<1x32xf32>
    %6 = vector.extract_strided_slice %2 {offsets = [3, 0], sizes = [1, 32], strides = [1, 1]} : vector<8x32xf32> to vector<1x32xf32>
    %7 = vector.extract_strided_slice %2 {offsets = [4, 0], sizes = [1, 32], strides = [1, 1]} : vector<8x32xf32> to vector<1x32xf32>
    %8 = vector.extract_strided_slice %2 {offsets = [5, 0], sizes = [1, 32], strides = [1, 1]} : vector<8x32xf32> to vector<1x32xf32>
    %c0_3 = arith.constant 0 : index
    %c0_4 = arith.constant 0 : index
    %9 = vector.load %arg2[%c0_3, %c0_4] : memref<32x32xbf16, #tpu.memory_space<vmem>>, vector<32x32xbf16>
    %cst = arith.constant dense<0.000000e+00> : vector<8x32xf32>
    %10 = tpu.matmul %1, %9, %cst {dimension_numbers = #tpu.dot_dimension_numbers<[1], [0], [0], [1], [0, 0, 1, 1], [], []>} : vector<8x32xbf16>, vector<32x32xbf16>, vector<8x32xf32> -> vector<8x32xf32>
    %11 = vector.broadcast %3 : vector<1x32xf32> to vector<8x32xf32>
    %12 = arith.addf %10, %11 : vector<8x32xf32>
    %13 = arith.truncf %12 : vector<8x32xf32> to vector<8x32xbf16>
    %14 = arith.extf %13 : vector<8x32xbf16> to vector<8x32xf32>
    %cst_5 = arith.constant dense<0.000000e+00> : vector<8xf32>
    %15 = vector.multi_reduction <add>, %14, %cst_5 [1] : vector<8x32xf32> to vector<8xf32>
    %16 = vector.shape_cast %15 : vector<8xf32> to vector<8x1xf32>
    %cst_6 = arith.constant 3.200000e+01 : f32
    %17 = vector.broadcast %cst_6 : f32 to vector<8x1xf32>
    %18 = arith.divf %16, %17 : vector<8x1xf32>
    %19 = vector.broadcast %18 : vector<8x1xf32> to vector<8x32xf32>
    %20 = arith.subf %14, %19 : vector<8x32xf32>
    %21 = arith.mulf %20, %20 : vector<8x32xf32>
    %cst_7 = arith.constant dense<0.000000e+00> : vector<8xf32>
    %22 = vector.multi_reduction <add>, %21, %cst_7 [1] : vector<8x32xf32> to vector<8xf32>
    %23 = vector.shape_cast %22 : vector<8xf32> to vector<8x1xf32>
    %cst_8 = arith.constant 3.200000e+01 : f32
    %24 = vector.broadcast %cst_8 : f32 to vector<8x1xf32>
    %25 = arith.divf %23, %24 : vector<8x1xf32>
    %26 = vector.broadcast %18 : vector<8x1xf32> to vector<8x32xf32>
    %27 = arith.subf %14, %26 : vector<8x32xf32>
    %cst_9 = arith.constant 9.99999974E-6 : f32
    %28 = vector.broadcast %cst_9 : f32 to vector<8x1xf32>
    %29 = arith.addf %25, %28 : vector<8x1xf32>
    %30 = math.rsqrt %29 : vector<8x1xf32>
    %31 = vector.broadcast %30 : vector<8x1xf32> to vector<8x32xf32>
    %32 = arith.mulf %27, %31 : vector<8x32xf32>
    %33 = vector.broadcast %4 : vector<1x32xf32> to vector<8x32xf32>
    %34 = arith.mulf %32, %33 : vector<8x32xf32>
    %35 = vector.broadcast %5 : vector<1x32xf32> to vector<8x32xf32>
    %36 = arith.addf %34, %35 : vector<8x32xf32>
    %cst_10 = arith.constant 0.000000e+00 : f32
    %37 = vector.broadcast %cst_10 : f32 to vector<8x32xf32>
    %38 = arith.maximumf %36, %37 : vector<8x32xf32>
    %39 = arith.truncf %38 : vector<8x32xf32> to vector<8x32xbf16>
    %c0_11 = arith.constant 0 : index
    %c0_12 = arith.constant 0 : index
    %40 = vector.load %arg3[%c0_11, %c0_12] : memref<32x32xbf16, #tpu.memory_space<vmem>>, vector<32x32xbf16>
    %cst_13 = arith.constant dense<0.000000e+00> : vector<8x32xf32>
    %41 = tpu.matmul %39, %40, %cst_13 {dimension_numbers = #tpu.dot_dimension_numbers<[1], [0], [0], [1], [0, 0, 1, 1], [], []>} : vector<8x32xbf16>, vector<32x32xbf16>, vector<8x32xf32> -> vector<8x32xf32>
    %42 = vector.broadcast %6 : vector<1x32xf32> to vector<8x32xf32>
    %43 = arith.addf %41, %42 : vector<8x32xf32>
    %44 = arith.truncf %43 : vector<8x32xf32> to vector<8x32xbf16>
    %45 = arith.extf %44 : vector<8x32xbf16> to vector<8x32xf32>
    %cst_14 = arith.constant dense<0.000000e+00> : vector<8xf32>
    %46 = vector.multi_reduction <add>, %45, %cst_14 [1] : vector<8x32xf32> to vector<8xf32>
    %47 = vector.shape_cast %46 : vector<8xf32> to vector<8x1xf32>
    %cst_15 = arith.constant 3.200000e+01 : f32
    %48 = vector.broadcast %cst_15 : f32 to vector<8x1xf32>
    %49 = arith.divf %47, %48 : vector<8x1xf32>
    %50 = vector.broadcast %49 : vector<8x1xf32> to vector<8x32xf32>
    %51 = arith.subf %45, %50 : vector<8x32xf32>
    %52 = arith.mulf %51, %51 : vector<8x32xf32>
    %cst_16 = arith.constant dense<0.000000e+00> : vector<8xf32>
    %53 = vector.multi_reduction <add>, %52, %cst_16 [1] : vector<8x32xf32> to vector<8xf32>
    %54 = vector.shape_cast %53 : vector<8xf32> to vector<8x1xf32>
    %cst_17 = arith.constant 3.200000e+01 : f32
    %55 = vector.broadcast %cst_17 : f32 to vector<8x1xf32>
    %56 = arith.divf %54, %55 : vector<8x1xf32>
    %57 = vector.broadcast %49 : vector<8x1xf32> to vector<8x32xf32>
    %58 = arith.subf %45, %57 : vector<8x32xf32>
    %cst_18 = arith.constant 9.99999974E-6 : f32
    %59 = vector.broadcast %cst_18 : f32 to vector<8x1xf32>
    %60 = arith.addf %56, %59 : vector<8x1xf32>
    %61 = math.rsqrt %60 : vector<8x1xf32>
    %62 = vector.broadcast %61 : vector<8x1xf32> to vector<8x32xf32>
    %63 = arith.mulf %58, %62 : vector<8x32xf32>
    %64 = vector.broadcast %7 : vector<1x32xf32> to vector<8x32xf32>
    %65 = arith.mulf %63, %64 : vector<8x32xf32>
    %66 = vector.broadcast %8 : vector<1x32xf32> to vector<8x32xf32>
    %67 = arith.addf %65, %66 : vector<8x32xf32>
    %cst_19 = arith.constant 0.000000e+00 : f32
    %68 = vector.broadcast %cst_19 : f32 to vector<8x32xf32>
    %69 = arith.maximumf %67, %68 : vector<8x32xf32>
    %70 = arith.truncf %69 : vector<8x32xf32> to vector<8x32xbf16>
    %c0_20 = arith.constant 0 : index
    %c0_21 = arith.constant 0 : index
    %71 = vector.load %arg5[%c0_20, %c0_21] : memref<1x32xbf16, #tpu.memory_space<vmem>>, vector<1x32xbf16>
    %cst_22 = arith.constant dense<0.000000e+00> : vector<1x8xf32>
    %72 = tpu.matmul %71, %70, %cst_22 {dimension_numbers = #tpu.dot_dimension_numbers<[1], [1], [0], [0], [0, 0, 1, 0], [], []>} : vector<1x32xbf16>, vector<8x32xbf16>, vector<1x8xf32> -> vector<1x8xf32>
    %c0_23 = arith.constant 0 : index
    %73 = memref.load %arg6[%c0_23] : memref<1xf32, #tpu.memory_space<smem>>
    %74 = vector.broadcast %73 : f32 to vector<1x8xf32>
    %75 = arith.addf %72, %74 : vector<1x8xf32>
    %76 = arith.truncf %75 : vector<1x8xf32> to vector<1x8xbf16>
    %c0_24 = arith.constant 0 : index
    %c0_25 = arith.constant 0 : index
    %77 = vector.load %arg7[%c0_24, %c0_25] : memref<1x8xbf16, #tpu.memory_space<vmem>>, vector<1x8xbf16>
    tpu.vector_store %arg7[%c0_24, %c0_25], %76 {strides = array<i32>} : memref<1x8xbf16, #tpu.memory_space<vmem>>, vector<1x8xbf16>,
    return
  }
  func.func @transform_0(%arg0: i32) -> (i32, i32) {
    %c0_i32 = arith.constant 0 : i32
    %c0_i32_0 = arith.constant 0 : i32
    return %arg0, %c0_i32 : i32, i32
  }
  func.func @transform_1(%arg0: i32) -> (i32, i32) {
    %c0_i32 = arith.constant 0 : i32
    %c0_i32_0 = arith.constant 0 : i32
    %c0_i32_1 = arith.constant 0 : i32
    return %c0_i32, %c0_i32_0 : i32, i32
  }
  func.func @transform_2(%arg0: i32) -> (i32, i32) {
    %c0_i32 = arith.constant 0 : i32
    %c0_i32_0 = arith.constant 0 : i32
    %c0_i32_1 = arith.constant 0 : i32
    return %c0_i32, %c0_i32_0 : i32, i32
  }
  func.func @transform_3(%arg0: i32) -> (i32, i32) {
    %c0_i32 = arith.constant 0 : i32
    %c0_i32_0 = arith.constant 0 : i32
    %c0_i32_1 = arith.constant 0 : i32
    return %c0_i32, %c0_i32_0 : i32, i32
  }
  func.func @transform_4(%arg0: i32) -> (i32, i32) {
    %c0_i32 = arith.constant 0 : i32
    %c0_i32_0 = arith.constant 0 : i32
    %c0_i32_1 = arith.constant 0 : i32
    return %c0_i32, %c0_i32_0 : i32, i32
  }
  func.func @transform_5(%arg0: i32) -> i32 {
    %c0_i32 = arith.constant 0 : i32
    %c0_i32_0 = arith.constant 0 : i32
    return %c0_i32 : i32
  }
  func.func @transform_6(%arg0: i32) -> (i32, i32) {
    %c0_i32 = arith.constant 0 : i32
    %c0_i32_0 = arith.constant 0 : i32
    return %c0_i32, %arg0 : i32, i32
  }
}

</mosaic_0001>

<llo_original>
// kernel: tpu_custom_call.1
$region0: #{tpu_custom_call.1}
  #allocation0 [shape = 'u32[]', space=smem, size = 0x4, offset = 0x4, fixed_abs, tag = 'smem constant byte address 0x4 - core index']
  #allocation1 [shape = 'u32[144,128]{1,0:T(1,128)}', space=vmem, size = 0x12000, scoped, tag = 'internal scratch']
  #allocation2 [shape = 'f32[1]{0:T(128)S(6)}', space=smem, size = 0x200, scoped, tag = 'scoped memory for tpu_custom_call.1']
  %s0 = inlined_call_operand.hbm [shape: f32[8,32], index: 0, kind: input, shape index: {}]
  %s1 = inlined_call_operand.hbm [shape: bf16[32,32], index: 1, kind: input, shape index: {}]
  %s2 = inlined_call_operand.hbm [shape: bf16[32,32], index: 2, kind: input, shape index: {}]
  %s3 = inlined_call_operand.vmem [shape: f32[8,32], index: 3, kind: input, shape index: {}]
  %s4 = inlined_call_operand.vmem [shape: bf16[1,32], index: 4, kind: input, shape index: {}]
  %s5 = inlined_call_operand.<no memory space> [shape: f32[1], index: 5, kind: input, shape index: {}]
  %s6 = inlined_call_operand.hbm [shape: bf16[1,8], index: 6, kind: output, shape index: {}]
  %s7 = sld [smem:[#allocation0]]
  $region46: #{tpu_custom_call.1} parent=0
    _
  %s9 = ssub.s32 1, %s7
  %s10 = scalar_select 0, %s9, %s7
  %11 = sst [smem:[#allocation2]] %s5
  $region1: #{tpu_custom_call.1} parent=0
    #allocation3 [shape = 'u8[4096]{0}', space=vmem, size = 0x1000, scoped, tag = 'input window, operand 0, single buffered']
    #allocation4 [shape = 's32[1]{0}', space=sflag, size = 0x4, scoped, tag = 'scoped memory for tpu_custom_call.1']
    #allocation5 [shape = 's32[1]{0}', space=sflag, size = 0x4, scoped, tag = 'scoped memory for tpu_custom_call.1']
    #allocation6 [shape = 'u8[8192]{0}', space=vmem, size = 0x2000, scoped, tag = 'input window, operand 1, single buffered']
    #allocation7 [shape = 's32[1]{0}', space=sflag, size = 0x4, scoped, tag = 'scoped memory for tpu_custom_call.1']
    #allocation8 [shape = 'u8[8192]{0}', space=vmem, size = 0x2000, scoped, tag = 'input window, operand 2, single buffered']
    #allocation9 [shape = 'u8[512]{0}', space=vmem, size = 0x400, scoped, tag = 'output window, operand 0, single buffered']
    %12 = vsyncpa [#allocation4], 0
    %13 = vsyncpa [#allocation7], 0
    %14 = vsyncpa [#allocation5], 0
    // Predicated region
    $region2: #{tpu_custom_call.1} parent=1 // pred_check
      _
    $region3: #{tpu_custom_call.1} parent=1 // pred_check_branch
      %16 = sbr.rel (0) target = $region5
    $region4: #{tpu_custom_call.1} parent=1 // pred_region
      %s18 = ssub.s32 128, 128
      %19 = vsyncadd [#allocation4], %s18
      %s21 = sshll.u32 [#allocation3], 4
      %s22 = int_to_ptr.vmem [resolvable:$true] %s21
      %24 = dma.hbm_to_vmem [thread:$0]  %s0, 128, %s22, [#allocation4]
    $region5: #{tpu_custom_call.1} parent=1 // pred_fallthru
      _
    // Predicated region
    $region6: #{tpu_custom_call.1} parent=1 // pred_check
      _
    $region7: #{tpu_custom_call.1} parent=1 // pred_check_branch
      %26 = sbr.rel (0) target = $region9
    $region8: #{tpu_custom_call.1} parent=1 // pred_region
      %s28 = ssub.s32 256, 256
      %29 = vsyncadd [#allocation7], %s28
      %s30 = sshll.u32 [#allocation6], 4
      %s31 = int_to_ptr.vmem [resolvable:$true] %s30
      %36 = dma.hbm_to_vmem [thread:$0]  %s1, 256, %s31, [#allocation7], 64, 64, 4
    $region9: #{tpu_custom_call.1} parent=1 // pred_fallthru
      _
    // Predicated region
    $region10: #{tpu_custom_call.1} parent=1 // pred_check
      _
    $region11: #{tpu_custom_call.1} parent=1 // pred_check_branch
      %38 = sbr.rel (0) target = $region13
    $region12: #{tpu_custom_call.1} parent=1 // pred_region
      %s40 = ssub.s32 256, 256
      %41 = vsyncadd [#allocation7], %s40
      %s42 = sshll.u32 [#allocation8], 4
      %s43 = int_to_ptr.vmem [resolvable:$true] %s42
      %48 = dma.hbm_to_vmem [thread:$0]  %s2, 256, %s43, [#allocation7], 64, 64, 4
    $region13: #{tpu_custom_call.1} parent=1 // pred_fallthru
      _
    // Predicated region
    $region14: #{tpu_custom_call.1} parent=1 // pred_check
      _
    $region15: #{tpu_custom_call.1} parent=1 // pred_check_branch
      %50 = sbr.rel (0) target = $region17
    $region16: #{tpu_custom_call.1} parent=1 // pred_region
      _
    $region17: #{tpu_custom_call.1} parent=1 // pred_fallthru
      _
    // Predicated region
    $region18: #{tpu_custom_call.1} parent=1 // pred_check
      _
    $region19: #{tpu_custom_call.1} parent=1 // pred_check_branch
      %52 = sbr.rel (0) target = $region21
    $region20: #{tpu_custom_call.1} parent=1 // pred_region
      _
    $region21: #{tpu_custom_call.1} parent=1 // pred_fallthru
      _
    // Predicated region
    $region22: #{tpu_custom_call.1} parent=1 // pred_check
      _
    $region23: #{tpu_custom_call.1} parent=1 // pred_check_branch
      %54 = sbr.rel (0) target = $region25
    $region24: #{tpu_custom_call.1} parent=1 // pred_region
      _
    $region25: #{tpu_custom_call.1} parent=1 // pred_fallthru
      _
    // Predicated region
    $region26: #{tpu_custom_call.1} parent=1 // pred_check
      _
    $region27: #{tpu_custom_call.1} parent=1 // pred_check_branch
      %56 = sbr.rel (0) target = $region29
    $region28: #{tpu_custom_call.1} parent=1 // pred_region
      %57 = dma.done [#allocation4], 128
    $region29: #{tpu_custom_call.1} parent=1 // pred_fallthru
      _
    // Predicated region
    $region30: #{tpu_custom_call.1} parent=1 // pred_check
      _
    $region31: #{tpu_custom_call.1} parent=1 // pred_check_branch
      %59 = sbr.rel (0) target = $region33
    $region32: #{tpu_custom_call.1} parent=1 // pred_region
      %60 = dma.done [#allocation7], 256
    $region33: #{tpu_custom_call.1} parent=1 // pred_fallthru
      _
    // Predicated region
    $region34: #{tpu_custom_call.1} parent=1 // pred_check
      _
    $region35: #{tpu_custom_call.1} parent=1 // pred_check_branch
      %62 = sbr.rel (0) target = $region37
    $region36: #{tpu_custom_call.1} parent=1 // pred_region
      %63 = dma.done [#allocation7], 256
    $region37: #{tpu_custom_call.1} parent=1 // pred_fallthru
      _
    %v65 = vld [vmem:[#allocation3] sm:$0xff]
    %v66 = vpack.c.bf16 %v65, %v65
    %v67 = vld [vmem:[%s3] sm:$0xff]
    %v68 = vld [vmem:[#allocation6] sm:$0xf]
    %v69 = vld [vmem:[#allocation6 + $0x4] sm:$0xf]
    %v70 = vld [vmem:[#allocation6 + $0x8] sm:$0xf]
    %v71 = vld [vmem:[#allocation6 + $0xc] sm:$0xf]
    %v72 = vlaneseq
    %v73 = vshrl.u32 %v72, 7
    %v74 = vsub.s32 0, %v73
    %v75 = vrot.slane %v67, %v74
    %v80 = vunpack.c.l.b16 %v68
    %v81 = vunpack.c.l.b16 %v69
    %v82 = vunpack.c.l.b16 %v70
    %v83 = vunpack.c.l.b16 %v71
    %v84 = vpack.c.b16 %v81, %v80
    %v85 = vpack.c.b16 %v83, %v82
    %vm88 = vcmask 261120
    %v90 = vsel %vm88, %v66, 0
    %92 = vmatprep.subr.bf16.mxu0 0
    %93 = vmatpush1.bf16.msra.mxu0 %v84
    %94 = vmatprep.subr.bf16.mxu0 0
    %95 = vmatpush1.bf16.msra.mxu0 %v85
    %96 = vmatprep.subr.bf16.mxu0 0
    %97 = vmatpush1.bf16.msra.mxu0 0
    %98 = vmatprep.subr.bf16.mxu0 0
    %99 = vmatpush1.bf16.msra.mxu0 0
    %100 = vmatprep.subr.bf16.mxu0 0
    %101 = vmatpush1.bf16.msra.mxu0 0
    %102 = vmatprep.subr.bf16.mxu0 0
    %103 = vmatpush1.bf16.msra.mxu0 0
    %104 = vmatprep.subr.bf16.mxu0 0
    %105 = vmatpush1.bf16.msra.mxu0 0
    %106 = vmatprep.subr.bf16.mxu0 0
    %107 = vmatpush1.bf16.msra.mxu0 0
    %108 = vmatprep.subr.bf16.mxu0 0
    %109 = vmatpush1.bf16.msra.mxu0 0
    %110 = vmatprep.subr.bf16.mxu0 0
    %111 = vmatpush1.bf16.msra.mxu0 0
    %112 = vmatprep.subr.bf16.mxu0 0
    %113 = vmatpush1.bf16.msra.mxu0 0
    %114 = vmatprep.subr.bf16.mxu0 0
    %115 = vmatpush1.bf16.msra.mxu0 0
    %116 = vmatprep.subr.bf16.mxu0 0
    %117 = vmatpush1.bf16.msra.mxu0 0
    %118 = vmatprep.subr.bf16.mxu0 0
    %119 = vmatpush1.bf16.msra.mxu0 0
    %120 = vmatprep.subr.bf16.mxu0 0
    %121 = vmatpush1.bf16.msra.mxu0 0
    %122 = vmatprep.subr.bf16.mxu0 0
    %123 = vmatpush1.bf16.msra.mxu0 0
    %124 = vmatprep.mubr.bf16.mxu0 0
    %125 = vmatmul.mubr.bf16.gmra.mrb[0].mxu0 %v90
    %v126 = vpop.f32.mrb[0].mxu0
    %v127 = vadd.f32 %v75, %v126
    %v128 = vpop.f32.mrb[0].mxu0
    %v129 = vpop.f32.mrb[0].mxu0
    %v130 = vpop.f32.mrb[0].mxu0
    %131 = vdwg.mxu0
    %v132 = vpack.c.bf16 %v127, %v127
    %v133 = vunpack.c.l.bf16 %v132
    %v134 = vsel %vm88, %v133, 0.0
    %135 = vadd.xlane.f32.xlu0 %v134
    %v136 = vpop.xlane.xlu0 %135
    %v137 = vrcp.pop 32.0
    %v138 = vmul.f32 %v136, %v137
    %v139 = vsub.f32 %v133, %v138
    %v140 = vmul.f32 %v139, %v139
    %v141 = vsel %vm88, %v140, 0.0
    %142 = vadd.xlane.f32.xlu0 %v141
    %v143 = vpop.xlane.xlu0 %142
    %v144 = vmul.f32 %v143, %v137
    %v145 = vadd.f32 %v144, 1e-05
    %v146 = vrsqrt.pop %v145
    %v147 = vmul.f32 %v139, %v146
    %v148 = vlaneseq
    %v149 = vshrl.u32 %v148, 7
    %v150 = vsub.s32 1, %v149
    %v151 = vrot.slane %v67, %v150
    %v152 = vmul.f32 %v147, %v151
    %v153 = vlaneseq
    %v154 = vshrl.u32 %v153, 7
    %v155 = vsub.s32 2, %v154
    %v156 = vrot.slane %v67, %v155
    %v157 = vadd.f32 %v152, %v156
    %v158 = vmax.f32 %v157, 0.0
    %v159 = vpack.c.bf16 %v158, %v158
    %v160 = vld [vmem:[#allocation8] sm:$0xf]
    %v161 = vld [vmem:[#allocation8 + $0x4] sm:$0xf]
    %v162 = vld [vmem:[#allocation8 + $0x8] sm:$0xf]
    %v163 = vld [vmem:[#allocation8 + $0xc] sm:$0xf]
    %v164 = vlaneseq
    %v165 = vshrl.u32 %v164, 7
    %v166 = vsub.s32 3, %v165
    %v167 = vrot.slane %v67, %v166
    %v172 = vunpack.c.l.b16 %v160
    %v173 = vunpack.c.l.b16 %v161
    %v174 = vunpack.c.l.b16 %v162
    %v175 = vunpack.c.l.b16 %v163
    %v176 = vpack.c.b16 %v173, %v172
    %v177 = vpack.c.b16 %v175, %v174
    %v181 = vsel %vm88, %v159, 0
    %183 = vmatprep.subr.bf16.mxu0 0
    %184 = vmatpush1.bf16.msra.mxu0 %v176
    %185 = vmatprep.subr.bf16.mxu0 0
    %186 = vmatpush1.bf16.msra.mxu0 %v177
    %187 = vmatprep.subr.bf16.mxu0 0
    %188 = vmatpush1.bf16.msra.mxu0 0
    %189 = vmatprep.subr.bf16.mxu0 0
    %190 = vmatpush1.bf16.msra.mxu0 0
    %191 = vmatprep.subr.bf16.mxu0 0
    %192 = vmatpush1.bf16.msra.mxu0 0
    %193 = vmatprep.subr.bf16.mxu0 0
    %194 = vmatpush1.bf16.msra.mxu0 0
    %195 = vmatprep.subr.bf16.mxu0 0
    %196 = vmatpush1.bf16.msra.mxu0 0
    %197 = vmatprep.subr.bf16.mxu0 0
    %198 = vmatpush1.bf16.msra.mxu0 0
    %199 = vmatprep.subr.bf16.mxu0 0
    %200 = vmatpush1.bf16.msra.mxu0 0
    %201 = vmatprep.subr.bf16.mxu0 0
    %202 = vmatpush1.bf16.msra.mxu0 0
    %203 = vmatprep.subr.bf16.mxu0 0
    %204 = vmatpush1.bf16.msra.mxu0 0
    %205 = vmatprep.subr.bf16.mxu0 0
    %206 = vmatpush1.bf16.msra.mxu0 0
    %207 = vmatprep.subr.bf16.mxu0 0
    %208 = vmatpush1.bf16.msra.mxu0 0
    %209 = vmatprep.subr.bf16.mxu0 0
    %210 = vmatpush1.bf16.msra.mxu0 0
    %211 = vmatprep.subr.bf16.mxu0 0
    %212 = vmatpush1.bf16.msra.mxu0 0
    %213 = vmatprep.subr.bf16.mxu0 0
    %214 = vmatpush1.bf16.msra.mxu0 0
    %215 = vmatprep.mubr.bf16.mxu0 0
    %216 = vmatmul.mubr.bf16.gmra.mrb[0].mxu0 %v181
    %v217 = vpop.f32.mrb[0].mxu0
    %v218 = vadd.f32 %v167, %v217
    %v219 = vpop.f32.mrb[0].mxu0
    %v220 = vpop.f32.mrb[0].mxu0
    %v221 = vpop.f32.mrb[0].mxu0
    %222 = vdwg.mxu0
    %v223 = vpack.c.bf16 %v218, %v218
    %v224 = vunpack.c.l.bf16 %v223
    %v225 = vsel %vm88, %v224, 0.0
    %226 = vadd.xlane.f32.xlu0 %v225
    %v227 = vpop.xlane.xlu0 %226
    %v228 = vmul.f32 %v227, %v137
    %v229 = vsub.f32 %v224, %v228
    %v230 = vmul.f32 %v229, %v229
    %v231 = vsel %vm88, %v230, 0.0
    %232 = vadd.xlane.f32.xlu0 %v231
    %v233 = vpop.xlane.xlu0 %232
    %v234 = vmul.f32 %v233, %v137
    %v235 = vadd.f32 %v234, 1e-05
    %v236 = vrsqrt.pop %v235
    %v237 = vmul.f32 %v229, %v236
    %v238 = vlaneseq
    %v239 = vshrl.u32 %v238, 7
    %v240 = vsub.s32 4, %v239
    %v241 = vrot.slane %v67, %v240
    %v242 = vmul.f32 %v237, %v241
    %v243 = vlaneseq
    %v244 = vshrl.u32 %v243, 7
    %v245 = vsub.s32 5, %v244
    %v246 = vrot.slane %v67, %v245
    %v247 = vadd.f32 %v242, %v246
    %v248 = vmax.f32 %v247, 0.0
    %v249 = vpack.c.bf16 %v248, %v248
    %v250 = vld [vmem:[%s4] sm:$0x1]
    %s251 = sld [smem:[#allocation2]]
    %v252 = vstv %s251
    %v254 = vsel %vm88, %v250, 0
    %v257 = vsel %vm88, %v249, 0
    %259 = vmatprep.subr.bf16.mxu0 0
    %260 = vmatpush1.bf16.xpose.msra.mxu0 %v257
    %261 = vmatprep.subr.bf16.mxu0 0
    %262 = vmatpush1.bf16.xpose.msra.mxu0 0
    %263 = vmatprep.subr.bf16.mxu0 0
    %264 = vmatpush1.bf16.xpose.msra.mxu0 0
    %265 = vmatprep.subr.bf16.mxu0 0
    %266 = vmatpush1.bf16.xpose.msra.mxu0 0
    %267 = vmatprep.subr.bf16.mxu0 0
    %268 = vmatpush1.bf16.xpose.msra.mxu0 0
    %269 = vmatprep.subr.bf16.mxu0 0
    %270 = vmatpush1.bf16.xpose.msra.mxu0 0
    %271 = vmatprep.subr.bf16.mxu0 0
    %272 = vmatpush1.bf16.xpose.msra.mxu0 0
    %273 = vmatprep.subr.bf16.mxu0 0
    %274 = vmatpush1.bf16.xpose.msra.mxu0 0
    %275 = vmatprep.subr.bf16.mxu0 0
    %276 = vmatpush1.bf16.xpose.msra.mxu0 0
    %277 = vmatprep.subr.bf16.mxu0 0
    %278 = vmatpush1.bf16.xpose.msra.mxu0 0
    %279 = vmatprep.subr.bf16.mxu0 0
    %280 = vmatpush1.bf16.xpose.msra.mxu0 0
    %281 = vmatprep.subr.bf16.mxu0 0
    %282 = vmatpush1.bf16.xpose.msra.mxu0 0
    %283 = vmatprep.subr.bf16.mxu0 0
    %284 = vmatpush1.bf16.xpose.msra.mxu0 0
    %285 = vmatprep.subr.bf16.mxu0 0
    %286 = vmatpush1.bf16.xpose.msra.mxu0 0
    %287 = vmatprep.subr.bf16.mxu0 0
    %288 = vmatpush1.bf16.xpose.msra.mxu0 0
    %289 = vmatprep.subr.bf16.mxu0 0
    %290 = vmatpush1.bf16.xpose.msra.mxu0 0
    %291 = vmatprep.mubr.bf16.mxu0 0
    %292 = vmatmul.mubr.bf16.gmra.mrb[0].mxu0 %v254
    %v293 = vpop.f32.mrb[0].mxu0
    %v294 = vadd.f32 %v252, %v293
    %v295 = vpop.f32.mrb[0].mxu0
    %v296 = vpop.f32.mrb[0].mxu0
    %v297 = vpop.f32.mrb[0].mxu0
    %298 = vdwg.mxu0
    %v299 = vpack.c.bf16 %v294, %v294
    %vm300 = vcmask 57344
    %vm301 = vsmask.f32 256
    %vm302 = vmand %vm300, %vm301
    %v303 = vld [vmem:[#allocation9] sm:$0x1]
    %v304 = vsel %vm302, %v299, %v303
    %305 = vst [vmem:[#allocation9] sm:$0x1] %v304
    // Predicated region
    $region38: #{tpu_custom_call.1} parent=1 // pred_check
      _
    $region39: #{tpu_custom_call.1} parent=1 // pred_check_branch
      %307 = sbr.rel (0) target = $region41
    $region40: #{tpu_custom_call.1} parent=1 // pred_region
      %s309 = ssub.s32 16, 16
      %310 = vsyncadd [#allocation5], %s309
      %s312 = sshll.u32 [#allocation9], 4
      %s313 = int_to_ptr.vmem [resolvable:$true] %s312
      %315 = dma.vmem_to_hbm [thread:$0]  %s313, 16, %s6, [#allocation5]
    $region41: #{tpu_custom_call.1} parent=1 // pred_fallthru
      _
    // Predicated region
    $region42: #{tpu_custom_call.1} parent=1 // pred_check
      _
    $region43: #{tpu_custom_call.1} parent=1 // pred_check_branch
      %317 = sbr.rel (0) target = $region45
    $region44: #{tpu_custom_call.1} parent=1 // pred_region
      %318 = dma.done [#allocation5], 16
    $region45: #{tpu_custom_call.1} parent=1 // pred_fallthru
      _
    %319 = vsyncpa [#allocation4], 1
    %320 = vsyncpa [#allocation7], 1
    %321 = vsyncpa [#allocation5], 1

// kernel: tpu_custom_call.1
$region0: #{tpu_custom_call.1}
  #allocation0 [shape = 'u32[]', space=smem, size = 0x4, offset = 0x4, fixed_abs, tag = 'smem constant byte address 0x4 - core index']
  #allocation1 [shape = 'u32[144,128]{1,0:T(1,128)}', space=vmem, size = 0x12000, scoped, tag = 'internal scratch']
  #allocation2 [shape = 'f32[1]{0:T(128)S(6)}', space=smem, size = 0x200, scoped, tag = 'scoped memory for tpu_custom_call.1']
  %s0 = inlined_call_operand.hbm [shape: f32[8,32], index: 0, kind: input, shape index: {}]
  %s1 = inlined_call_operand.hbm [shape: bf16[32,32], index: 1, kind: input, shape index: {}]
  %s2 = inlined_call_operand.hbm [shape: bf16[32,32], index: 2, kind: input, shape index: {}]
  %s3 = inlined_call_operand.vmem [shape: f32[8,32], index: 3, kind: input, shape index: {}]
  %s4 = inlined_call_operand.vmem [shape: bf16[1,32], index: 4, kind: input, shape index: {}]
  %s5 = inlined_call_operand.<no memory space> [shape: f32[1], index: 5, kind: input, shape index: {}]
  %s6 = inlined_call_operand.hbm [shape: bf16[1,8], index: 6, kind: output, shape index: {}]
  %s7 = sld [smem:[#allocation0]]
  $region46: #{tpu_custom_call.1} parent=0
    _
  %s9 = ssub.s32 1, %s7
  %s10 = scalar_select 0, %s9, %s7
  %11 = sst [smem:[#allocation2]] %s5
  $region1: #{tpu_custom_call.1} parent=0
    #allocation3 [shape = 'u8[4096]{0}', space=vmem, size = 0x1000, scoped, tag = 'input window, operand 0, single buffered']
    #allocation4 [shape = 's32[1]{0}', space=sflag, size = 0x4, scoped, tag = 'scoped memory for tpu_custom_call.1']
    #allocation5 [shape = 's32[1]{0}', space=sflag, size = 0x4, scoped, tag = 'scoped memory for tpu_custom_call.1']
    #allocation6 [shape = 'u8[8192]{0}', space=vmem, size = 0x2000, scoped, tag = 'input window, operand 1, single buffered']
    #allocation7 [shape = 's32[1]{0}', space=sflag, size = 0x4, scoped, tag = 'scoped memory for tpu_custom_call.1']
    #allocation8 [shape = 'u8[8192]{0}', space=vmem, size = 0x2000, scoped, tag = 'input window, operand 2, single buffered']
    #allocation9 [shape = 'u8[512]{0}', space=vmem, size = 0x400, scoped, tag = 'output window, operand 0, single buffered']
    %12 = vsyncpa [#allocation4], 0
    %13 = vsyncpa [#allocation7], 0
    %14 = vsyncpa [#allocation5], 0
    // Predicated region
    $region2: #{tpu_custom_call.1} parent=1 // pred_check
      _
    $region3: #{tpu_custom_call.1} parent=1 // pred_check_branch
      %16 = sbr.rel (0) target = $region5
    $region4: #{tpu_custom_call.1} parent=1 // pred_region
      %s18 = ssub.s32 128, 128
      %19 = vsyncadd [#allocation4], %s18
      %s21 = sshll.u32 [#allocation3], 4
      %s22 = int_to_ptr.vmem [resolvable:$true] %s21
      %24 = dma.hbm_to_vmem [thread:$0]  %s0, 128, %s22, [#allocation4]
    $region5: #{tpu_custom_call.1} parent=1 // pred_fallthru
      _
    // Predicated region
    $region6: #{tpu_custom_call.1} parent=1 // pred_check
      _
    $region7: #{tpu_custom_call.1} parent=1 // pred_check_branch
      %26 = sbr.rel (0) target = $region9
    $region8: #{tpu_custom_call.1} parent=1 // pred_region
      %s28 = ssub.s32 256, 256
      %29 = vsyncadd [#allocation7], %s28
      %s30 = sshll.u32 [#allocation6], 4
      %s31 = int_to_ptr.vmem [resolvable:$true] %s30
      %36 = dma.hbm_to_vmem [thread:$0]  %s1, 256, %s31, [#allocation7], 64, 64, 4
    $region9: #{tpu_custom_call.1} parent=1 // pred_fallthru
      _
    // Predicated region
    $region10: #{tpu_custom_call.1} parent=1 // pred_check
      _
    $region11: #{tpu_custom_call.1} parent=1 // pred_check_branch
      %38 = sbr.rel (0) target = $region13
    $region12: #{tpu_custom_call.1} parent=1 // pred_region
      %s40 = ssub.s32 256, 256
      %41 = vsyncadd [#allocation7], %s40
      %s42 = sshll.u32 [#allocation8], 4
      %s43 = int_to_ptr.vmem [resolvable:$true] %s42
      %48 = dma.hbm_to_vmem [thread:$0]  %s2, 256, %s43, [#allocation7], 64, 64, 4
    $region13: #{tpu_custom_call.1} parent=1 // pred_fallthru
      _
    // Predicated region
    $region14: #{tpu_custom_call.1} parent=1 // pred_check
      _
    $region15: #{tpu_custom_call.1} parent=1 // pred_check_branch
      %50 = sbr.rel (0) target = $region17
    $region16: #{tpu_custom_call.1} parent=1 // pred_region
      _
    $region17: #{tpu_custom_call.1} parent=1 // pred_fallthru
      _
    // Predicated region
    $region18: #{tpu_custom_call.1} parent=1 // pred_check
      _
    $region19: #{tpu_custom_call.1} parent=1 // pred_check_branch
      %52 = sbr.rel (0) target = $region21
    $region20: #{tpu_custom_call.1} parent=1 // pred_region
      _
    $region21: #{tpu_custom_call.1} parent=1 // pred_fallthru
      _
    // Predicated region
    $region22: #{tpu_custom_call.1} parent=1 // pred_check
      _
    $region23: #{tpu_custom_call.1} parent=1 // pred_check_branch
      %54 = sbr.rel (0) target = $region25
    $region24: #{tpu_custom_call.1} parent=1 // pred_region
      _
    $region25: #{tpu_custom_call.1} parent=1 // pred_fallthru
      _
    // Predicated region
    $region26: #{tpu_custom_call.1} parent=1 // pred_check
      _
    $region27: #{tpu_custom_call.1} parent=1 // pred_check_branch
      %56 = sbr.rel (0) target = $region29
    $region28: #{tpu_custom_call.1} parent=1 // pred_region
      %57 = dma.done [#allocation4], 128
    $region29: #{tpu_custom_call.1} parent=1 // pred_fallthru
      _
    // Predicated region
    $region30: #{tpu_custom_call.1} parent=1 // pred_check
      _
    $region31: #{tpu_custom_call.1} parent=1 // pred_check_branch
      %59 = sbr.rel (0) target = $region33
    $region32: #{tpu_custom_call.1} parent=1 // pred_region
      %60 = dma.done [#allocation7], 256
    $region33: #{tpu_custom_call.1} parent=1 // pred_fallthru
      _
    // Predicated region
    $region34: #{tpu_custom_call.1} parent=1 // pred_check
      _
    $region35: #{tpu_custom_call.1} parent=1 // pred_check_branch
      %62 = sbr.rel (0) target = $region37
    $region36: #{tpu_custom_call.1} parent=1 // pred_region
      %63 = dma.done [#allocation7], 256
    $region37: #{tpu_custom_call.1} parent=1 // pred_fallthru
      _
    %v65 = vld [vmem:[#allocation3] sm:$0xff]
    %v66 = vpack.c.bf16 %v65, %v65
    %v67 = vld [vmem:[%s3] sm:$0xff]
    %v68 = vld [vmem:[#allocation6] sm:$0xf]
    %v69 = vld [vmem:[#allocation6 + $0x4] sm:$0xf]
    %v70 = vld [vmem:[#allocation6 + $0x8] sm:$0xf]
    %v71 = vld [vmem:[#allocation6 + $0xc] sm:$0xf]
    %v72 = vlaneseq
    %v73 = vshrl.u32 %v72, 7
    %v74 = vsub.s32 0, %v73
    %v75 = vrot.slane %v67, %v74
    %v80 = vunpack.c.l.b16 %v68
    %v81 = vunpack.c.l.b16 %v69
    %v82 = vunpack.c.l.b16 %v70
    %v83 = vunpack.c.l.b16 %v71
    %v84 = vpack.c.b16 %v81, %v80
    %v85 = vpack.c.b16 %v83, %v82
    %vm88 = vcmask 261120
    %v90 = vsel %vm88, %v66, 0
    %92 = vmatprep.subr.bf16.mxu0 0
    %93 = vmatpush1.bf16.msra.mxu0 %v84
    %94 = vmatprep.subr.bf16.mxu0 0
    %95 = vmatpush1.bf16.msra.mxu0 %v85
    %96 = vmatprep.subr.bf16.mxu0 0
    %97 = vmatpush1.bf16.msra.mxu0 0
    %98 = vmatprep.subr.bf16.mxu0 0
    %99 = vmatpush1.bf16.msra.mxu0 0
    %100 = vmatprep.subr.bf16.mxu0 0
    %101 = vmatpush1.bf16.msra.mxu0 0
    %102 = vmatprep.subr.bf16.mxu0 0
    %103 = vmatpush1.bf16.msra.mxu0 0
    %104 = vmatprep.subr.bf16.mxu0 0
    %105 = vmatpush1.bf16.msra.mxu0 0
    %106 = vmatprep.subr.bf16.mxu0 0
    %107 = vmatpush1.bf16.msra.mxu0 0
    %108 = vmatprep.subr.bf16.mxu0 0
    %109 = vmatpush1.bf16.msra.mxu0 0
    %110 = vmatprep.subr.bf16.mxu0 0
    %111 = vmatpush1.bf16.msra.mxu0 0
    %112 = vmatprep.subr.bf16.mxu0 0
    %113 = vmatpush1.bf16.msra.mxu0 0
    %114 = vmatprep.subr.bf16.mxu0 0
    %115 = vmatpush1.bf16.msra.mxu0 0
    %116 = vmatprep.subr.bf16.mxu0 0
    %117 = vmatpush1.bf16.msra.mxu0 0
    %118 = vmatprep.subr.bf16.mxu0 0
    %119 = vmatpush1.bf16.msra.mxu0 0
    %120 = vmatprep.subr.bf16.mxu0 0
    %121 = vmatpush1.bf16.msra.mxu0 0
    %122 = vmatprep.subr.bf16.mxu0 0
    %123 = vmatpush1.bf16.msra.mxu0 0
    %124 = vmatprep.mubr.bf16.mxu0 0
    %125 = vmatmul.mubr.bf16.gmra.mrb[0].mxu0 %v90
    %v126 = vpop.f32.mrb[0].mxu0
    %v127 = vadd.f32 %v75, %v126
    %v128 = vpop.f32.mrb[0].mxu0
    %v129 = vpop.f32.mrb[0].mxu0
    %v130 = vpop.f32.mrb[0].mxu0
    %131 = vdwg.mxu0
    %v132 = vpack.c.bf16 %v127, %v127
    %v133 = vunpack.c.l.bf16 %v132
    %v134 = vsel %vm88, %v133, 0.0
    %135 = vadd.xlane.f32.xlu0 %v134
    %v136 = vpop.xlane.xlu0 %135
    %v137 = vrcp.pop 32.0
    %v138 = vmul.f32 %v136, %v137
    %v139 = vsub.f32 %v133, %v138
    %v140 = vmul.f32 %v139, %v139
    %v141 = vsel %vm88, %v140, 0.0
    %142 = vadd.xlane.f32.xlu0 %v141
    %v143 = vpop.xlane.xlu0 %142
    %v144 = vmul.f32 %v143, %v137
    %v145 = vadd.f32 %v144, 1e-05
    %v146 = vrsqrt.pop %v145
    %v147 = vmul.f32 %v139, %v146
    %v148 = vlaneseq
    %v149 = vshrl.u32 %v148, 7
    %v150 = vsub.s32 1, %v149
    %v151 = vrot.slane %v67, %v150
    %v152 = vmul.f32 %v147, %v151
    %v153 = vlaneseq
    %v154 = vshrl.u32 %v153, 7
    %v155 = vsub.s32 2, %v154
    %v156 = vrot.slane %v67, %v155
    %v157 = vadd.f32 %v152, %v156
    %v158 = vmax.f32 %v157, 0.0
    %v159 = vpack.c.bf16 %v158, %v158
    %v160 = vld [vmem:[#allocation8] sm:$0xf]
    %v161 = vld [vmem:[#allocation8 + $0x4] sm:$0xf]
    %v162 = vld [vmem:[#allocation8 + $0x8] sm:$0xf]
    %v163 = vld [vmem:[#allocation8 + $0xc] sm:$0xf]
    %v164 = vlaneseq
    %v165 = vshrl.u32 %v164, 7
    %v166 = vsub.s32 3, %v165
    %v167 = vrot.slane %v67, %v166
    %v172 = vunpack.c.l.b16 %v160
    %v173 = vunpack.c.l.b16 %v161
    %v174 = vunpack.c.l.b16 %v162
    %v175 = vunpack.c.l.b16 %v163
    %v176 = vpack.c.b16 %v173, %v172
    %v177 = vpack.c.b16 %v175, %v174
    %v181 = vsel %vm88, %v159, 0
    %183 = vmatprep.subr.bf16.mxu0 0
    %184 = vmatpush1.bf16.msra.mxu0 %v176
    %185 = vmatprep.subr.bf16.mxu0 0
    %186 = vmatpush1.bf16.msra.mxu0 %v177
    %187 = vmatprep.subr.bf16.mxu0 0
    %188 = vmatpush1.bf16.msra.mxu0 0
    %189 = vmatprep.subr.bf16.mxu0 0
    %190 = vmatpush1.bf16.msra.mxu0 0
    %191 = vmatprep.subr.bf16.mxu0 0
    %192 = vmatpush1.bf16.msra.mxu0 0
    %193 = vmatprep.subr.bf16.mxu0 0
    %194 = vmatpush1.bf16.msra.mxu0 0
    %195 = vmatprep.subr.bf16.mxu0 0
    %196 = vmatpush1.bf16.msra.mxu0 0
    %197 = vmatprep.subr.bf16.mxu0 0
    %198 = vmatpush1.bf16.msra.mxu0 0
    %199 = vmatprep.subr.bf16.mxu0 0
    %200 = vmatpush1.bf16.msra.mxu0 0
    %201 = vmatprep.subr.bf16.mxu0 0
    %202 = vmatpush1.bf16.msra.mxu0 0
    %203 = vmatprep.subr.bf16.mxu0 0
    %204 = vmatpush1.bf16.msra.mxu0 0
    %205 = vmatprep.subr.bf16.mxu0 0
    %206 = vmatpush1.bf16.msra.mxu0 0
    %207 = vmatprep.subr.bf16.mxu0 0
    %208 = vmatpush1.bf16.msra.mxu0 0
    %209 = vmatprep.subr.bf16.mxu0 0
    %210 = vmatpush1.bf16.msra.mxu0 0
    %211 = vmatprep.subr.bf16.mxu0 0
    %212 = vmatpush1.bf16.msra.mxu0 0
    %213 = vmatprep.subr.bf16.mxu0 0
    %214 = vmatpush1.bf16.msra.mxu0 0
    %215 = vmatprep.mubr.bf16.mxu0 0
    %216 = vmatmul.mubr.bf16.gmra.mrb[0].mxu0 %v181
    %v217 = vpop.f32.mrb[0].mxu0
    %v218 = vadd.f32 %v167, %v217
    %v219 = vpop.f32.mrb[0].mxu0
    %v220 = vpop.f32.mrb[0].mxu0
    %v221 = vpop.f32.mrb[0].mxu0
    %222 = vdwg.mxu0
    %v223 = vpack.c.bf16 %v218, %v218
    %v224 = vunpack.c.l.bf16 %v223
    %v225 = vsel %vm88, %v224, 0.0
    %226 = vadd.xlane.f32.xlu0 %v225
    %v227 = vpop.xlane.xlu0 %226
    %v228 = vmul.f32 %v227, %v137
    %v229 = vsub.f32 %v224, %v228
    %v230 = vmul.f32 %v229, %v229
    %v231 = vsel %vm88, %v230, 0.0
    %232 = vadd.xlane.f32.xlu0 %v231
    %v233 = vpop.xlane.xlu0 %232
    %v234 = vmul.f32 %v233, %v137
    %v235 = vadd.f32 %v234, 1e-05
    %v236 = vrsqrt.pop %v235
    %v237 = vmul.f32 %v229, %v236
    %v238 = vlaneseq
    %v239 = vshrl.u32 %v238, 7
    %v240 = vsub.s32 4, %v239
    %v241 = vrot.slane %v67, %v240
    %v242 = vmul.f32 %v237, %v241
    %v243 = vlaneseq
    %v244 = vshrl.u32 %v243, 7
    %v245 = vsub.s32 5, %v244
    %v246 = vrot.slane %v67, %v245
    %v247 = vadd.f32 %v242, %v246
    %v248 = vmax.f32 %v247, 0.0
    %v249 = vpack.c.bf16 %v248, %v248
    %v250 = vld [vmem:[%s4] sm:$0x1]
    %s251 = sld [smem:[#allocation2]]
    %v252 = vstv %s251
    %v254 = vsel %vm88, %v250, 0
    %v257 = vsel %vm88, %v249, 0
    %259 = vmatprep.subr.bf16.mxu0 0
    %260 = vmatpush1.bf16.xpose.msra.mxu0 %v257
    %261 = vmatprep.subr.bf16.mxu0 0
    %262 = vmatpush1.bf16.xpose.msra.mxu0 0
    %263 = vmatprep.subr.bf16.mxu0 0
    %264 = vmatpush1.bf16.xpose.msra.mxu0 0
    %265 = vmatprep.subr.bf16.mxu0 0
    %266 = vmatpush1.bf16.xpose.msra.mxu0 0
    %267 = vmatprep.subr.bf16.mxu0 0
    %268 = vmatpush1.bf16.xpose.msra.mxu0 0
    %269 = vmatprep.subr.bf16.mxu0 0
    %270 = vmatpush1.bf16.xpose.msra.mxu0 0
    %271 = vmatprep.subr.bf16.mxu0 0
    %272 = vmatpush1.bf16.xpose.msra.mxu0 0
    %273 = vmatprep.subr.bf16.mxu0 0
    %274 = vmatpush1.bf16.xpose.msra.mxu0 0
    %275 = vmatprep.subr.bf16.mxu0 0
    %276 = vmatpush1.bf16.xpose.msra.mxu0 0
    %277 = vmatprep.subr.bf16.mxu0 0
    %278 = vmatpush1.bf16.xpose.msra.mxu0 0
    %279 = vmatprep.subr.bf16.mxu0 0
    %280 = vmatpush1.bf16.xpose.msra.mxu0 0
    %281 = vmatprep.subr.bf16.mxu0 0
    %282 = vmatpush1.bf16.xpose.msra.mxu0 0
    %283 = vmatprep.subr.bf16.mxu0 0
    %284 = vmatpush1.bf16.xpose.msra.mxu0 0
    %285 = vmatprep.subr.bf16.mxu0 0
    %286 = vmatpush1.bf16.xpose.msra.mxu0 0
    %287 = vmatprep.subr.bf16.mxu0 0
    %288 = vmatpush1.bf16.xpose.msra.mxu0 0
    %289 = vmatprep.subr.bf16.mxu0 0
    %290 = vmatpush1.bf16.xpose.msra.mxu0 0
    %291 = vmatprep.mubr.bf16.mxu0 0
    %292 = vmatmul.mubr.bf16.gmra.mrb[0].mxu0 %v254
    %v293 = vpop.f32.mrb[0].mxu0
    %v294 = vadd.f32 %v252, %v293
    %v295 = vpop.f32.mrb[0].mxu0
    %v296 = vpop.f32.mrb[0].mxu0
    %v297 = vpop.f32.mrb[0].mxu0
    %298 = vdwg.mxu0
    %v299 = vpack.c.bf16 %v294, %v294
    %vm300 = vcmask 57344
    %vm301 = vsmask.f32 256
    %vm302 = vmand %vm300, %vm301
    %v303 = vld [vmem:[#allocation9] sm:$0x1]
    %v304 = vsel %vm302, %v299, %v303
    %305 = vst [vmem:[#allocation9] sm:$0x1] %v304
    // Predicated region
    $region38: #{tpu_custom_call.1} parent=1 // pred_check
      _
    $region39: #{tpu_custom_call.1} parent=1 // pred_check_branch
      %307 = sbr.rel (0) target = $region41
    $region40: #{tpu_custom_call.1} parent=1 // pred_region
      %s309 = ssub.s32 16, 16
      %310 = vsyncadd [#allocation5], %s309
      %s312 = sshll.u32 [#allocation9], 4
      %s313 = int_to_ptr.vmem [resolvable:$true] %s312
      %315 = dma.vmem_to_hbm [thread:$0]  %s313, 16, %s6, [#allocation5]
    $region41: #{tpu_custom_call.1} parent=1 // pred_fallthru
      _
    // Predicated region
    $region42: #{tpu_custom_call.1} parent=1 // pred_check
      _
    $region43: #{tpu_custom_call.1} parent=1 // pred_check_branch
      %317 = sbr.rel (0) target = $region45
    $region44: #{tpu_custom_call.1} parent=1 // pred_region
      %318 = dma.done [#allocation5], 16
    $region45: #{tpu_custom_call.1} parent=1 // pred_fallthru
      _
    %319 = vsyncpa [#allocation4], 1
    %320 = vsyncpa [#allocation7], 1
    %321 = vsyncpa [#allocation5], 1

</llo_original>
